<compile_context>
chip_gen: v5e
topology: v5e:2x2
jax: 0.10.0
libtpu: 0.0.40
codegen_flags: <defaults>
</compile_context>

<pallas_src>
import jax
import jax.numpy as jnp
from jax.experimental import pallas as pl
from jax.experimental.pallas import tpu as pltpu

_LANE = 128


def _state_value_kernel(xT_ref, w1_ref, b1_ref, w2_ref, b2_ref, o_ref):
    # xT_ref: (S, TB)  batch tile, transposed (batch on lanes)
    # w1_ref: (H, S)   fc1 weight (torch layout), resident
    # b1_ref: (H, 1)   fc1 bias as a column, resident
    # w2_ref: (H, 1)   fc2 weight as a column, resident
    # b2_ref: (1,)     fc2 bias scalar, in SMEM
    # o_ref : (1, TB)  lane-dense output tile
    S = xT_ref.shape[0]
    H = w1_ref.shape[0]
    TB = o_ref.shape[1]

    xT = xT_ref[...].astype(jnp.float32)                                  # (S, TB)

    # Layer 1: hT = W1 @ xT + b1 via S unrolled VPU FMAs (S is small & static).
    hT = jnp.broadcast_to(b1_ref[...].astype(jnp.float32), (H, TB))
    for s in range(S):  # unrolled at trace time
        hT = hT + w1_ref[:, s:s + 1].astype(jnp.float32) * xT[s:s + 1, :]
    hT = jnp.maximum(hT, 0.0)                                             # ReLU (VPU)

    # Layer 2: outT[0, b] = sum_h w2[h] * hT[h, b] + b2  (sublane reduce -> XLU).
    outT = jnp.sum(w2_ref[...].astype(jnp.float32) * hT, axis=0, keepdims=True)
    o_ref[...] = (outT + b2_ref[0]).astype(o_ref.dtype)


def _round_up(n, m):
    return ((n + m - 1) // m) * m


def state_value_forward(x, w1, b1, w2, b2, *, tb=None):
    """Fused forward of StateValue: relu(x @ w1.T + b1) @ w2.T + b2.

    x  : (B, S) float32 (or bf16)
    w1 : (H, S)  torch fc1.weight layout
    b1 : (H,)
    w2 : (1, H)  torch fc2.weight layout
    b2 : (1,)
    returns (B, 1) in x.dtype
    """
    B, S = x.shape
    H = w1.shape[0]

    if tb is None:
        # At least one lane width; capped so x/out tiles and the (H, TB) f32
        # intermediate stay far below scoped VMEM even on v7x (64 MiB physical).
        tb = max(_LANE, min(1024, _round_up(B, _LANE)))
    assert tb % _LANE == 0

    b_pad = _round_up(B, tb)
    grid = (b_pad // tb,)

    # Wrapper-side layout plumbing: transpose + zero-pad batch onto lanes.
    xT = jnp.zeros((S, b_pad), x.dtype).at[:, :B].set(x.T)
    b1_col = b1.reshape(H, 1)
    w2_col = w2.reshape(H, 1)
    b2_s = b2.reshape(1)

    out = pl.pallas_call(
        _state_value_kernel,
        out_shape=jax.ShapeDtypeStruct((1, b_pad), x.dtype),
        grid=grid,
        in_specs=[
            pl.BlockSpec((S, tb), lambda i: (0, i)),             # x stream (pipelined)
            pl.BlockSpec((H, S), lambda i: (0, 0)),              # w1, resident
            pl.BlockSpec((H, 1), lambda i: (0, 0)),              # b1, resident
            pl.BlockSpec((H, 1), lambda i: (0, 0)),              # w2, resident
            pl.BlockSpec(memory_space=pltpu.MemorySpace.SMEM),   # b2 scalar in SMEM
        ],
        out_specs=pl.BlockSpec((1, tb), lambda i: (0, i)),       # lane-dense output
        compiler_params=pltpu.CompilerParams(
            dimension_semantics=("parallel",),                   # shard batch tiles across TCs
            vmem_limit_bytes=32 * 1024 * 1024,
        ),
    )(xT, w1, b1_col, w2_col, b2_s)

    # Back to the module's (B, 1) shape (cheap XLA reshape outside the kernel).
    return out[0, :B].reshape(B, 1)


def init_params(key, state_dim, hidden_dim):
    """torch.nn.Linear default init (uniform(-1/sqrt(fan_in), 1/sqrt(fan_in))),
    parameters kept in torch layout."""
    k1, k2, k3, k4 = jax.random.split(key, 4)
    bound1 = 1.0 / jnp.sqrt(jnp.float32(state_dim))
    bound2 = 1.0 / jnp.sqrt(jnp.float32(hidden_dim))
    w1 = jax.random.uniform(k1, (hidden_dim, state_dim), jnp.float32, -bound1, bound1)
    b1 = jax.random.uniform(k2, (hidden_dim,), jnp.float32, -bound1, bound1)
    w2 = jax.random.uniform(k3, (1, hidden_dim), jnp.float32, -bound2, bound2)
    b2 = jax.random.uniform(k4, (1,), jnp.float32, -bound2, bound2)
    return w1, b1, w2, b2


if __name__ == "__main__":
    key = jax.random.PRNGKey(0)
    k_x, k_p = jax.random.split(key)

    batch, state_dim, hidden_dim = 8, 4, 32
    x = jax.random.normal(k_x, (batch, state_dim), jnp.float32)
    w1, b1, w2, b2 = init_params(k_p, state_dim, hidden_dim)

    out = state_value_forward(x, w1, b1, w2, b2)
    out = jax.block_until_ready(out)

    # Reference check (plain JAX, torch-layout weights).
    ref = jnp.maximum(x @ w1.T + b1, 0.0) @ w2.T + b2
    assert out.shape == (batch, 1)
    assert jnp.allclose(out, ref, atol=1e-5, rtol=1e-5), (out, ref)

    print("KERNEL_OK")
</pallas_src>

<mosaic_0001>
module attributes {stable_mosaic.version = 11 : i64} {
  func.func @_state_value_kernel(%arg0: i32, %arg1: memref<4x128xf32, #tpu.memory_space<vmem>>, %arg2: memref<32x4xf32, #tpu.memory_space<vmem>>, %arg3: memref<32x1xf32, #tpu.memory_space<vmem>>, %arg4: memref<32x1xf32, #tpu.memory_space<vmem>>, %arg5: memref<1xf32, #tpu.memory_space<smem>>, %arg6: memref<1x128xf32, #tpu.memory_space<vmem>>) attributes {dimension_semantics = [#tpu.dimension_semantics<parallel>], iteration_bounds = array<i64: 1>, scalar_prefetch = 0 : i64, scratch_operands = 0 : i64, tpu.core_type = #tpu.core_type<tc>, window_params = [{transform_indices = @transform_0, window_bounds = array<i64: 4, 128>}, {pipeline_mode = #tpu.pipeline_mode<synchronous>, transform_indices = @transform_1, window_bounds = array<i64: 32, 4>}, {pipeline_mode = #tpu.pipeline_mode<synchronous>, transform_indices = @transform_2, window_bounds = array<i64: 32, 1>}, {pipeline_mode = #tpu.pipeline_mode<synchronous>, transform_indices = @transform_3, window_bounds = array<i64: 32, 1>}, {transform_indices = @transform_4, window_bounds = array<i64: 1>}, {transform_indices = @transform_5, window_bounds = array<i64: 1, 128>}]} {
    %c0 = arith.constant 0 : index
    %c0_0 = arith.constant 0 : index
    %0 = vector.load %arg1[%c0, %c0_0] : memref<4x128xf32, #tpu.memory_space<vmem>>, vector<4x128xf32>
    %c0_1 = arith.constant 0 : index
    %c0_2 = arith.constant 0 : index
    %1 = vector.load %arg3[%c0_1, %c0_2] : memref<32x1xf32, #tpu.memory_space<vmem>>, vector<32x1xf32>
    %2 = vector.shape_cast %1 : vector<32x1xf32> to vector<32x1xf32>
    %3 = vector.broadcast %2 : vector<32x1xf32> to vector<32x128xf32>
    %c0_3 = arith.constant 0 : index
    %c0_4 = arith.constant 0 : index
    %4 = vector.load %arg2[%c0_3, %c0_4] : memref<32x4xf32, #tpu.memory_space<vmem>>, vector<32x1xf32>
    %5 = vector.extract_strided_slice %0 {offsets = [0, 0], sizes = [1, 128], strides = [1, 1]} : vector<4x128xf32> to vector<1x128xf32>
    %6 = vector.broadcast %4 : vector<32x1xf32> to vector<32x128xf32>
    %7 = vector.broadcast %5 : vector<1x128xf32> to vector<32x128xf32>
    %8 = arith.mulf %6, %7 : vector<32x128xf32>
    %9 = arith.addf %3, %8 : vector<32x128xf32>
    %c0_5 = arith.constant 0 : index
    %c1 = arith.constant 1 : index
    %10 = vector.load %arg2[%c0_5, %c1] : memref<32x4xf32, #tpu.memory_space<vmem>>, vector<32x1xf32>
    %11 = vector.extract_strided_slice %0 {offsets = [1, 0], sizes = [1, 128], strides = [1, 1]} : vector<4x128xf32> to vector<1x128xf32>
    %12 = vector.broadcast %10 : vector<32x1xf32> to vector<32x128xf32>
    %13 = vector.broadcast %11 : vector<1x128xf32> to vector<32x128xf32>
    %14 = arith.mulf %12, %13 : vector<32x128xf32>
    %15 = arith.addf %9, %14 : vector<32x128xf32>
    %c0_6 = arith.constant 0 : index
    %c2 = arith.constant 2 : index
    %16 = vector.load %arg2[%c0_6, %c2] : memref<32x4xf32, #tpu.memory_space<vmem>>, vector<32x1xf32>
    %17 = vector.extract_strided_slice %0 {offsets = [2, 0], sizes = [1, 128], strides = [1, 1]} : vector<4x128xf32> to vector<1x128xf32>
    %18 = vector.broadcast %16 : vector<32x1xf32> to vector<32x128xf32>
    %19 = vector.broadcast %17 : vector<1x128xf32> to vector<32x128xf32>
    %20 = arith.mulf %18, %19 : vector<32x128xf32>
    %21 = arith.addf %15, %20 : vector<32x128xf32>
    %c0_7 = arith.constant 0 : index
    %c3 = arith.constant 3 : index
    %22 = vector.load %arg2[%c0_7, %c3] : memref<32x4xf32, #tpu.memory_space<vmem>>, vector<32x1xf32>
    %23 = vector.extract_strided_slice %0 {offsets = [3, 0], sizes = [1, 128], strides = [1, 1]} : vector<4x128xf32> to vector<1x128xf32>
    %24 = vector.broadcast %22 : vector<32x1xf32> to vector<32x128xf32>
    %25 = vector.broadcast %23 : vector<1x128xf32> to vector<32x128xf32>
    %26 = arith.mulf %24, %25 : vector<32x128xf32>
    %27 = arith.addf %21, %26 : vector<32x128xf32>
    %cst = arith.constant 0.000000e+00 : f32
    %28 = vector.broadcast %cst : f32 to vector<32x128xf32>
    %29 = arith.maximumf %27, %28 : vector<32x128xf32>
    %c0_8 = arith.constant 0 : index
    %c0_9 = arith.constant 0 : index
    %30 = vector.load %arg4[%c0_8, %c0_9] : memref<32x1xf32, #tpu.memory_space<vmem>>, vector<32x1xf32>
    %31 = vector.broadcast %30 : vector<32x1xf32> to vector<32x128xf32>
    %32 = arith.mulf %31, %29 : vector<32x128xf32>
    %cst_10 = arith.constant dense<0.000000e+00> : vector<128xf32>
    %33 = vector.multi_reduction <add>, %32, %cst_10 [0] : vector<32x128xf32> to vector<128xf32>
    %34 = vector.shape_cast %33 : vector<128xf32> to vector<1x128xf32>
    %c0_11 = arith.constant 0 : index
    %35 = memref.load %arg5[%c0_11] : memref<1xf32, #tpu.memory_space<smem>>
    %36 = vector.broadcast %35 : f32 to vector<1x128xf32>
    %37 = arith.addf %34, %36 : vector<1x128xf32>
    %c0_12 = arith.constant 0 : index
    %c0_13 = arith.constant 0 : index
    %38 = vector.load %arg6[%c0_12, %c0_13] : memref<1x128xf32, #tpu.memory_space<vmem>>, vector<1x128xf32>
    tpu.vector_store %arg6[%c0_12, %c0_13], %37 {strides = array<i32>} : memref<1x128xf32, #tpu.memory_space<vmem>>, vector<1x128xf32>,
    return
  }
  func.func @transform_0(%arg0: i32) -> (i32, i32) {
    %c0_i32 = arith.constant 0 : i32
    %c0_i32_0 = arith.constant 0 : i32
    return %c0_i32, %arg0 : i32, i32
  }
  func.func @transform_1(%arg0: i32) -> (i32, i32) {
    %c0_i32 = arith.constant 0 : i32
    %c0_i32_0 = arith.constant 0 : i32
    %c0_i32_1 = arith.constant 0 : i32
    return %c0_i32, %c0_i32_0 : i32, i32
  }
  func.func @transform_2(%arg0: i32) -> (i32, i32) {
    %c0_i32 = arith.constant 0 : i32
    %c0_i32_0 = arith.constant 0 : i32
    %c0_i32_1 = arith.constant 0 : i32
    return %c0_i32, %c0_i32_0 : i32, i32
  }
  func.func @transform_3(%arg0: i32) -> (i32, i32) {
    %c0_i32 = arith.constant 0 : i32
    %c0_i32_0 = arith.constant 0 : i32
    %c0_i32_1 = arith.constant 0 : i32
    return %c0_i32, %c0_i32_0 : i32, i32
  }
  func.func @transform_4(%arg0: i32) -> i32 {
    %c0_i32 = arith.constant 0 : i32
    %c0_i32_0 = arith.constant 0 : i32
    return %c0_i32 : i32
  }
  func.func @transform_5(%arg0: i32) -> (i32, i32) {
    %c0_i32 = arith.constant 0 : i32
    %c0_i32_0 = arith.constant 0 : i32
    return %c0_i32, %arg0 : i32, i32
  }
}

</mosaic_0001>

<llo_original>
// kernel: tpu_custom_call.1
$region0: #{tpu_custom_call.1}
  #allocation0 [shape = 'u32[]', space=smem, size = 0x4, offset = 0x4, fixed_abs, tag = 'smem constant byte address 0x4 - core index']
  #allocation1 [shape = 'u32[72,128]{1,0:T(1,128)}', space=vmem, size = 0x9000, scoped, tag = 'internal scratch']
  #allocation2 [shape = 'f32[1]{0:T(128)S(6)}', space=smem, size = 0x200, scoped, tag = 'scoped memory for tpu_custom_call.1']
  %s0 = inlined_call_operand.vmem [shape: f32[4,128], index: 0, kind: input, shape index: {}]
  %s1 = inlined_call_operand.vmem [shape: f32[32,4], index: 1, kind: input, shape index: {}]
  %s2 = inlined_call_operand.vmem [shape: f32[32,1], index: 2, kind: input, shape index: {}]
  %s3 = inlined_call_operand.vmem [shape: f32[32,1], index: 3, kind: input, shape index: {}]
  %s4 = inlined_call_operand.<no memory space> [shape: f32[1], index: 4, kind: input, shape index: {}]
  %s5 = inlined_call_operand.hbm [shape: f32[1,128], index: 5, kind: output, shape index: {}]
  %s6 = sld [smem:[#allocation0]]
  $region30: #{tpu_custom_call.1} parent=0
    _
  %s8 = ssub.s32 1, %s6
  %s9 = scalar_select 0, %s8, %s6
  %10 = sst [smem:[#allocation2]] %s4
  $region1: #{tpu_custom_call.1} parent=0
    #allocation3 [shape = 'u8[512]{0}', space=vmem, size = 0x400, scoped, tag = 'output window, operand 0, single buffered']
    #allocation4 [shape = 's32[1]{0}', space=sflag, size = 0x4, scoped, tag = 'scoped memory for tpu_custom_call.1']
    %11 = vsyncpa [#allocation4], 0
    // Predicated region
    $region2: #{tpu_custom_call.1} parent=1 // pred_check
      _
    $region3: #{tpu_custom_call.1} parent=1 // pred_check_branch
      %13 = sbr.rel (0) target = $region5
    $region4: #{tpu_custom_call.1} parent=1 // pred_region
      _
    $region5: #{tpu_custom_call.1} parent=1 // pred_fallthru
      _
    // Predicated region
    $region6: #{tpu_custom_call.1} parent=1 // pred_check
      _
    $region7: #{tpu_custom_call.1} parent=1 // pred_check_branch
      %15 = sbr.rel (0) target = $region9
    $region8: #{tpu_custom_call.1} parent=1 // pred_region
      _
    $region9: #{tpu_custom_call.1} parent=1 // pred_fallthru
      _
    // Predicated region
    $region10: #{tpu_custom_call.1} parent=1 // pred_check
      _
    $region11: #{tpu_custom_call.1} parent=1 // pred_check_branch
      %17 = sbr.rel (0) target = $region13
    $region12: #{tpu_custom_call.1} parent=1 // pred_region
      _
    $region13: #{tpu_custom_call.1} parent=1 // pred_fallthru
      _
    // Predicated region
    $region14: #{tpu_custom_call.1} parent=1 // pred_check
      _
    $region15: #{tpu_custom_call.1} parent=1 // pred_check_branch
      %19 = sbr.rel (0) target = $region17
    $region16: #{tpu_custom_call.1} parent=1 // pred_region
      _
    $region17: #{tpu_custom_call.1} parent=1 // pred_fallthru
      _
    // Predicated region
    $region18: #{tpu_custom_call.1} parent=1 // pred_check
      _
    $region19: #{tpu_custom_call.1} parent=1 // pred_check_branch
      %21 = sbr.rel (0) target = $region21
    $region20: #{tpu_custom_call.1} parent=1 // pred_region
      _
    $region21: #{tpu_custom_call.1} parent=1 // pred_fallthru
      _
    %v22 = vld [vmem:[%s0] sm:$0xf]
    %v23 = vld [vmem:[%s2] sm:$0xff]
    %v24 = vld [vmem:[%s2 + $0x8] sm:$0xff]
    %v25 = vld [vmem:[%s2 + $0x10] sm:$0xff]
    %v26 = vld [vmem:[%s2 + $0x18] sm:$0xff]
    %28 = vset.pattern.permute.xlu0 0
    %29 = vperm.xlu0 %28, %v23
    %v30 = vpop.permute.xlu0 %29
    %33 = vset.pattern.permute.xlu0 0
    %34 = vperm.xlu0 %33, %v24
    %v35 = vpop.permute.xlu0 %34
    %38 = vset.pattern.permute.xlu0 0
    %39 = vperm.xlu0 %38, %v25
    %v40 = vpop.permute.xlu0 %39
    %43 = vset.pattern.permute.xlu0 0
    %44 = vperm.xlu0 %43, %v26
    %v45 = vpop.permute.xlu0 %44
    %v47 = vld [vmem:[%s1] sm:$0xff]
    %v48 = vld [vmem:[%s1 + $0x8] sm:$0xff]
    %v49 = vld [vmem:[%s1 + $0x10] sm:$0xff]
    %v50 = vld [vmem:[%s1 + $0x18] sm:$0xff]
    %52 = vset.pattern.permute.xlu0 0
    %53 = vperm.xlu0 %52, %v47
    %v54 = vpop.permute.xlu0 %53
    %57 = vset.pattern.permute.xlu0 0
    %58 = vperm.xlu0 %57, %v48
    %v59 = vpop.permute.xlu0 %58
    %62 = vset.pattern.permute.xlu0 0
    %63 = vperm.xlu0 %62, %v49
    %v64 = vpop.permute.xlu0 %63
    %67 = vset.pattern.permute.xlu0 0
    %68 = vperm.xlu0 %67, %v50
    %v69 = vpop.permute.xlu0 %68
    %v71 = vperm.slane %v22, 0
    %v72 = vmul.f32 %v54, %v71
    %v73 = vmul.f32 %v59, %v71
    %v74 = vmul.f32 %v64, %v71
    %v75 = vmul.f32 %v69, %v71
    %v76 = vadd.f32 %v30, %v72
    %v77 = vadd.f32 %v35, %v73
    %v78 = vadd.f32 %v40, %v74
    %v79 = vadd.f32 %v45, %v75
    %80 = vset.pattern.permute.xlu0 1
    %81 = vperm.xlu0 %80, %v47
    %v82 = vpop.permute.xlu0 %81
    %84 = vset.pattern.permute.xlu0 1
    %85 = vperm.xlu0 %84, %v48
    %v86 = vpop.permute.xlu0 %85
    %88 = vset.pattern.permute.xlu0 1
    %89 = vperm.xlu0 %88, %v49
    %v90 = vpop.permute.xlu0 %89
    %92 = vset.pattern.permute.xlu0 1
    %93 = vperm.xlu0 %92, %v50
    %v94 = vpop.permute.xlu0 %93
    %v96 = vperm.slane %v22, 1
    %v97 = vmul.f32 %v82, %v96
    %v98 = vmul.f32 %v86, %v96
    %v99 = vmul.f32 %v90, %v96
    %v100 = vmul.f32 %v94, %v96
    %v101 = vadd.f32 %v76, %v97
    %v102 = vadd.f32 %v77, %v98
    %v103 = vadd.f32 %v78, %v99
    %v104 = vadd.f32 %v79, %v100
    %105 = vset.pattern.permute.xlu0 2
    %106 = vperm.xlu0 %105, %v47
    %v107 = vpop.permute.xlu0 %106
    %109 = vset.pattern.permute.xlu0 2
    %110 = vperm.xlu0 %109, %v48
    %v111 = vpop.permute.xlu0 %110
    %113 = vset.pattern.permute.xlu0 2
    %114 = vperm.xlu0 %113, %v49
    %v115 = vpop.permute.xlu0 %114
    %117 = vset.pattern.permute.xlu0 2
    %118 = vperm.xlu0 %117, %v50
    %v119 = vpop.permute.xlu0 %118
    %v121 = vperm.slane %v22, 2
    %v122 = vmul.f32 %v107, %v121
    %v123 = vmul.f32 %v111, %v121
    %v124 = vmul.f32 %v115, %v121
    %v125 = vmul.f32 %v119, %v121
    %v126 = vadd.f32 %v101, %v122
    %v127 = vadd.f32 %v102, %v123
    %v128 = vadd.f32 %v103, %v124
    %v129 = vadd.f32 %v104, %v125
    %130 = vset.pattern.permute.xlu0 3
    %131 = vperm.xlu0 %130, %v47
    %v132 = vpop.permute.xlu0 %131
    %134 = vset.pattern.permute.xlu0 3
    %135 = vperm.xlu0 %134, %v48
    %v136 = vpop.permute.xlu0 %135
    %138 = vset.pattern.permute.xlu0 3
    %139 = vperm.xlu0 %138, %v49
    %v140 = vpop.permute.xlu0 %139
    %142 = vset.pattern.permute.xlu0 3
    %143 = vperm.xlu0 %142, %v50
    %v144 = vpop.permute.xlu0 %143
    %v146 = vperm.slane %v22, 3
    %v147 = vmul.f32 %v132, %v146
    %v148 = vmul.f32 %v136, %v146
    %v149 = vmul.f32 %v140, %v146
    %v150 = vmul.f32 %v144, %v146
    %v151 = vadd.f32 %v126, %v147
    %v152 = vadd.f32 %v127, %v148
    %v153 = vadd.f32 %v128, %v149
    %v154 = vadd.f32 %v129, %v150
    %v155 = vmax.f32 %v151, 0.0
    %v156 = vmax.f32 %v152, 0.0
    %v157 = vmax.f32 %v153, 0.0
    %v158 = vmax.f32 %v154, 0.0
    %v159 = vld [vmem:[%s3] sm:$0xff]
    %v160 = vld [vmem:[%s3 + $0x8] sm:$0xff]
    %v161 = vld [vmem:[%s3 + $0x10] sm:$0xff]
    %v162 = vld [vmem:[%s3 + $0x18] sm:$0xff]
    %164 = vset.pattern.permute.xlu0 0
    %165 = vperm.xlu0 %164, %v159
    %v166 = vpop.permute.xlu0 %165
    %169 = vset.pattern.permute.xlu0 0
    %170 = vperm.xlu0 %169, %v160
    %v171 = vpop.permute.xlu0 %170
    %174 = vset.pattern.permute.xlu0 0
    %175 = vperm.xlu0 %174, %v161
    %v176 = vpop.permute.xlu0 %175
    %179 = vset.pattern.permute.xlu0 0
    %180 = vperm.xlu0 %179, %v162
    %v181 = vpop.permute.xlu0 %180
    %v183 = vmul.f32 %v166, %v155
    %v184 = vmul.f32 %v171, %v156
    %v185 = vmul.f32 %v176, %v157
    %v186 = vmul.f32 %v181, %v158
    %v187 = vadd.f32 %v183, %v184
    %v188 = vadd.f32 %v187, %v185
    %v189 = vadd.f32 %v188, %v186
    %v190 = vrot.slane %v189, 4
    %v191 = vadd.f32 %v189, %v190
    %v192 = vrot.slane %v191, 2
    %v193 = vadd.f32 %v191, %v192
    %v194 = vrot.slane %v193, 1
    %v195 = vadd.f32 %v193, %v194
    %s196 = sld [smem:[#allocation2]]
    %v197 = vstv %s196
    %v198 = vadd.f32 %v195, %v197
    %199 = vst [vmem:[#allocation3] sm:$0x1] %v198
    // Predicated region
    $region22: #{tpu_custom_call.1} parent=1 // pred_check
      _
    $region23: #{tpu_custom_call.1} parent=1 // pred_check_branch
      %201 = sbr.rel (0) target = $region25
    $region24: #{tpu_custom_call.1} parent=1 // pred_region
      %203 = vsyncadd [#allocation4], 0
      %s205 = sshll.u32 [#allocation3], 4
      %s206 = int_to_ptr.vmem [resolvable:$true] %s205
      %s207 = sshll.u32 %s5, 4
      %s208 = int_to_ptr.hbm [resolvable:$true] %s207
      %210 = dma.vmem_to_hbm [thread:$0]  %s206, 16, %s208, [#allocation4]
    $region25: #{tpu_custom_call.1} parent=1 // pred_fallthru
      _
    // Predicated region
    $region26: #{tpu_custom_call.1} parent=1 // pred_check
      _
    $region27: #{tpu_custom_call.1} parent=1 // pred_check_branch
      %212 = sbr.rel (0) target = $region29
    $region28: #{tpu_custom_call.1} parent=1 // pred_region
      %214 = dma.done [#allocation4], 16
    $region29: #{tpu_custom_call.1} parent=1 // pred_fallthru
      _
    %215 = vsyncpa [#allocation4], 1

</llo_original>
